<compile_context>
chip_gen: v7x
topology: tpu7x:2x2x1
jax: 0.10.0
libtpu: 0.0.40
codegen_flags: <defaults>
</compile_context>

<pallas_src>
import math

import jax
import jax.numpy as jnp
from jax.experimental import pallas as pl
from jax.experimental.pallas import tpu as pltpu


def _dyt_kernel(alpha_ref, x_ref, w_ref, b_ref, o_ref):
    # alpha_ref: (1, 1) f32 scalar in SMEM
    # x_ref:     (tm, L) tile in VMEM
    # w_ref:     (1, L)  in VMEM (weight tiled k times)
    # b_ref:     (1, L)  in VMEM (bias   tiled k times)
    alpha = alpha_ref[0, 0]
    w = w_ref[...]          # hoisted loads; broadcast happens once per tile
    b = b_ref[...]
    y = jnp.tanh(alpha * x_ref[...]) * w + b   # tanh -> EUP, muls/add -> VALU
    o_ref[...] = y.astype(o_ref.dtype)


def dyt(x, alpha, weight, bias, *,
        target_tile_bytes=2 << 20,        # ~2 MiB per (tm, L) buffer
        vmem_limit_bytes=32 << 20):       # safe on v5e/v6e/v7x
    """x: (B, N, C); alpha: scalar; weight/bias: (C,)."""
    B, N, C = x.shape
    M = B * N
    dtype = x.dtype
    itemsize = jnp.dtype(dtype).itemsize

    # ---- lane-dense packing factor: smallest k with (k*C) % 128 == 0 ----
    lane = 128
    k = lane // math.gcd(C, lane)
    L = k * C

    # ---- choose the row tile: big enough to amortize per-step overhead,
    #      small enough that double-buffered x + out fit VMEM comfortably ----
    bytes_per_packed_row = L * itemsize
    tm = int(target_tile_bytes // bytes_per_packed_row)
    tm = max(8, min(tm, 1024))
    tm = (tm // 8) * 8                      # sublane multiple
    R = pl.cdiv(M, k)                       # packed rows before padding
    R8 = ((R + 7) // 8) * 8
    tm = min(tm, R8)                        # don't tile far beyond the data

    # ---- pad rows so the packed row count is a multiple of tm ----
    Mp = ((M + k * tm - 1) // (k * tm)) * (k * tm)
    Rp = Mp // k

    x2 = x.reshape(M, C)
    if Mp != M:
        x2 = jnp.pad(x2, ((0, Mp - M), (0, 0)))   # zero rows -> result = bias, sliced off
    xp = x2.reshape(Rp, L)

    wp = jnp.tile(weight.astype(dtype).reshape(1, C), (1, k))
    bp = jnp.tile(bias.astype(dtype).reshape(1, C), (1, k))
    a2 = jnp.asarray(alpha, dtype=jnp.float32).reshape(1, 1)

    out = pl.pallas_call(
        _dyt_kernel,
        out_shape=jax.ShapeDtypeStruct((Rp, L), dtype),
        grid_spec=pl.GridSpec(
            grid=(Rp // tm,),
            in_specs=[
                pl.BlockSpec(memory_space=pltpu.SMEM),        # alpha scalar
                pl.BlockSpec((tm, L), lambda i: (i, 0)),      # x tile (lane-dense)
                pl.BlockSpec((1, L), lambda i: (0, 0)),       # weight (resident)
                pl.BlockSpec((1, L), lambda i: (0, 0)),       # bias   (resident)
            ],
            out_specs=pl.BlockSpec((tm, L), lambda i: (i, 0)),
        ),
        compiler_params=pltpu.CompilerParams(
            dimension_semantics=("parallel",),                # shards rows across TCs on v7x
            vmem_limit_bytes=vmem_limit_bytes,
        ),
    )(a2, xp, wp, bp)

    return out.reshape(Mp, C)[:M].reshape(B, N, C)


if __name__ == "__main__":
    key = jax.random.PRNGKey(0)
    B, N, C = 2, 8, 32  # batch, seq, num_features

    x = jax.random.normal(key, (B, N, C), dtype=jnp.float32)

    # Deterministic parameter init mirroring DyT.__init__:
    #   alpha = 0.5, weight = ones(C), bias = zeros(C)
    alpha = jnp.float32(0.5)
    weight = jnp.ones((C,), dtype=jnp.float32)
    bias = jnp.zeros((C,), dtype=jnp.float32)

    out = dyt(x, alpha, weight, bias)
    jax.block_until_ready(out)

    # Reference check (plain JAX) for semantics parity.
    ref = jnp.tanh(alpha * x) * weight + bias
    assert out.shape == x.shape
    assert jnp.allclose(out, ref, atol=1e-6, rtol=1e-6), "mismatch vs reference"

    print("KERNEL_OK")
</pallas_src>

<mosaic_0001>
module attributes {stable_mosaic.version = 11 : i64} {
  func.func @_dyt_kernel(%arg0: i32, %arg1: memref<1x1xf32, #tpu.memory_space<smem>>, %arg2: memref<8x128xf32, #tpu.memory_space<vmem>>, %arg3: memref<1x128xf32, #tpu.memory_space<vmem>>, %arg4: memref<1x128xf32, #tpu.memory_space<vmem>>, %arg5: memref<8x128xf32, #tpu.memory_space<vmem>>) attributes {dimension_semantics = [#tpu.dimension_semantics<parallel>], iteration_bounds = array<i64: 1>, scalar_prefetch = 0 : i64, scratch_operands = 0 : i64, tpu.core_type = #tpu.core_type<tc>, window_params = [{transform_indices = @transform_0, window_bounds = array<i64: 1, 1>}, {transform_indices = @transform_1, window_bounds = array<i64: 8, 128>}, {pipeline_mode = #tpu.pipeline_mode<synchronous>, transform_indices = @transform_2, window_bounds = array<i64: 1, 128>}, {pipeline_mode = #tpu.pipeline_mode<synchronous>, transform_indices = @transform_3, window_bounds = array<i64: 1, 128>}, {transform_indices = @transform_4, window_bounds = array<i64: 8, 128>}]} {
    %c0 = arith.constant 0 : index
    %c0_0 = arith.constant 0 : index
    %0 = memref.load %arg1[%c0, %c0_0] : memref<1x1xf32, #tpu.memory_space<smem>>
    %c0_1 = arith.constant 0 : index
    %c0_2 = arith.constant 0 : index
    %1 = vector.load %arg3[%c0_1, %c0_2] : memref<1x128xf32, #tpu.memory_space<vmem>>, vector<1x128xf32>
    %c0_3 = arith.constant 0 : index
    %c0_4 = arith.constant 0 : index
    %2 = vector.load %arg4[%c0_3, %c0_4] : memref<1x128xf32, #tpu.memory_space<vmem>>, vector<1x128xf32>
    %c0_5 = arith.constant 0 : index
    %c0_6 = arith.constant 0 : index
    %3 = vector.load %arg2[%c0_5, %c0_6] : memref<8x128xf32, #tpu.memory_space<vmem>>, vector<8x128xf32>
    %4 = vector.broadcast %0 : f32 to vector<8x128xf32>
    %5 = arith.mulf %4, %3 : vector<8x128xf32>
    %6 = math.tanh %5 : vector<8x128xf32>
    %7 = vector.broadcast %1 : vector<1x128xf32> to vector<8x128xf32>
    %8 = arith.mulf %6, %7 : vector<8x128xf32>
    %9 = vector.broadcast %2 : vector<1x128xf32> to vector<8x128xf32>
    %10 = arith.addf %8, %9 : vector<8x128xf32>
    %c0_7 = arith.constant 0 : index
    %c0_8 = arith.constant 0 : index
    %11 = vector.load %arg5[%c0_7, %c0_8] : memref<8x128xf32, #tpu.memory_space<vmem>>, vector<8x128xf32>
    tpu.vector_store %arg5[%c0_7, %c0_8], %10 {strides = array<i32>} : memref<8x128xf32, #tpu.memory_space<vmem>>, vector<8x128xf32>,
    return
  }
  func.func @transform_0(%arg0: i32) -> (i32, i32) {
    %c0_i32 = arith.constant 0 : i32
    %c0_i32_0 = arith.constant 0 : i32
    %c0_i32_1 = arith.constant 0 : i32
    return %c0_i32, %c0_i32_0 : i32, i32
  }
  func.func @transform_1(%arg0: i32) -> (i32, i32) {
    %c0_i32 = arith.constant 0 : i32
    %c0_i32_0 = arith.constant 0 : i32
    return %arg0, %c0_i32 : i32, i32
  }
  func.func @transform_2(%arg0: i32) -> (i32, i32) {
    %c0_i32 = arith.constant 0 : i32
    %c0_i32_0 = arith.constant 0 : i32
    %c0_i32_1 = arith.constant 0 : i32
    return %c0_i32, %c0_i32_0 : i32, i32
  }
  func.func @transform_3(%arg0: i32) -> (i32, i32) {
    %c0_i32 = arith.constant 0 : i32
    %c0_i32_0 = arith.constant 0 : i32
    %c0_i32_1 = arith.constant 0 : i32
    return %c0_i32, %c0_i32_0 : i32, i32
  }
  func.func @transform_4(%arg0: i32) -> (i32, i32) {
    %c0_i32 = arith.constant 0 : i32
    %c0_i32_0 = arith.constant 0 : i32
    return %arg0, %c0_i32 : i32, i32
  }
}

</mosaic_0001>

<llo_original>
// kernel: tpu_custom_call.1
$region0: #{tpu_custom_call.1}
  #allocation0 [shape = 'u32[]', space=smem, size = 0x4, offset = 0x4, fixed_abs, tag = 'smem constant byte address 0x4 - core index']
  #allocation1 [shape = 'u32[144,128]{1,0:T(1,128)}', space=vmem, size = 0x12000, scoped, tag = 'internal scratch']
  #allocation2 [shape = 'f32[1,1]{1,0:T(1,128)S(6)}', space=smem, size = 0x200, scoped, tag = 'scoped memory for tpu_custom_call.1']
  %s0 = inlined_call_operand.<no memory space> [shape: f32[1,1], index: 0, kind: input, shape index: {}]
  %s1 = inlined_call_operand.hbm [shape: f32[8,128], index: 1, kind: input, shape index: {}]
  %s2 = inlined_call_operand.vmem [shape: f32[1,128], index: 2, kind: input, shape index: {}]
  %s3 = inlined_call_operand.vmem [shape: f32[1,128], index: 3, kind: input, shape index: {}]
  %s4 = inlined_call_operand.hbm [shape: f32[8,128], index: 4, kind: output, shape index: {}]
  %s5 = sld [smem:[#allocation0]]
  $region30: #{tpu_custom_call.1} parent=0
    _
  %s7 = ssub.s32 1, %s5
  %s8 = scalar_select 0, %s7, %s5
  %9 = sst [smem:[#allocation2]] %s0
  $region1: #{tpu_custom_call.1} parent=0
    #allocation3 [shape = 'u8[4096]{0}', space=vmem, size = 0x1000, scoped, tag = 'input window, operand 1, single buffered']
    #allocation4 [shape = 's32[1]{0}', space=sflag, size = 0x4, scoped, tag = 'scoped memory for tpu_custom_call.1']
    #allocation5 [shape = 's32[1]{0}', space=sflag, size = 0x4, scoped, tag = 'scoped memory for tpu_custom_call.1']
    #allocation6 [shape = 'u8[4096]{0}', space=vmem, size = 0x1000, scoped, tag = 'output window, operand 0, single buffered']
    %10 = vsyncpa [#allocation4], 0
    %11 = vsyncpa [#allocation5], 0
    // Predicated region
    $region2: #{tpu_custom_call.1} parent=1 // pred_check
      _
    $region3: #{tpu_custom_call.1} parent=1 // pred_check_branch
      %13 = sbr.rel (0) target = $region5
    $region4: #{tpu_custom_call.1} parent=1 // pred_region
      _
    $region5: #{tpu_custom_call.1} parent=1 // pred_fallthru
      _
    // Predicated region
    $region6: #{tpu_custom_call.1} parent=1 // pred_check
      _
    $region7: #{tpu_custom_call.1} parent=1 // pred_check_branch
      %15 = sbr.rel (0) target = $region9
    $region8: #{tpu_custom_call.1} parent=1 // pred_region
      %s17 = ssub.s32 128, 128
      %18 = vsyncadd [#allocation4], %s17
      %s20 = sshll.u32 [#allocation3], 4
      %s21 = int_to_ptr.vmem [resolvable:$true] %s20
      %23 = dma.hbm_to_vmem [thread:$0]  %s1, 128, %s21, [#allocation4]
    $region9: #{tpu_custom_call.1} parent=1 // pred_fallthru
      _
    // Predicated region
    $region10: #{tpu_custom_call.1} parent=1 // pred_check
      _
    $region11: #{tpu_custom_call.1} parent=1 // pred_check_branch
      %25 = sbr.rel (0) target = $region13
    $region12: #{tpu_custom_call.1} parent=1 // pred_region
      _
    $region13: #{tpu_custom_call.1} parent=1 // pred_fallthru
      _
    // Predicated region
    $region14: #{tpu_custom_call.1} parent=1 // pred_check
      _
    $region15: #{tpu_custom_call.1} parent=1 // pred_check_branch
      %27 = sbr.rel (0) target = $region17
    $region16: #{tpu_custom_call.1} parent=1 // pred_region
      _
    $region17: #{tpu_custom_call.1} parent=1 // pred_fallthru
      _
    // Predicated region
    $region18: #{tpu_custom_call.1} parent=1 // pred_check
      _
    $region19: #{tpu_custom_call.1} parent=1 // pred_check_branch
      %29 = sbr.rel (0) target = $region21
    $region20: #{tpu_custom_call.1} parent=1 // pred_region
      %30 = dma.done [#allocation4], 128
    $region21: #{tpu_custom_call.1} parent=1 // pred_fallthru
      _
    %s31 = sld [smem:[#allocation2]]
    %v32 = vld [vmem:[%s2] sm:$0x1]
    %v33 = vld [vmem:[%s3] sm:$0x1]
    %v34 = vld [vmem:[#allocation3] sm:$0xff]
    %v35 = vstv %s31
    %v36 = vmul.f32 %v35, %v34
    %v37 = vtanh.pop %v36
    %v39 = vlaneseq
    %v40 = vshrl.u32 %v39, 7
    %v41 = vsub.s32 0, %v40
    %v42 = vrot.slane %v32, %v41
    %v44 = vmul.f32 %v37, %v42
    %v46 = vlaneseq
    %v47 = vshrl.u32 %v46, 7
    %v48 = vsub.s32 0, %v47
    %v49 = vrot.slane %v33, %v48
    %v51 = vadd.f32 %v44, %v49
    %52 = vst [vmem:[#allocation6] sm:$0xff] %v51
    // Predicated region
    $region22: #{tpu_custom_call.1} parent=1 // pred_check
      _
    $region23: #{tpu_custom_call.1} parent=1 // pred_check_branch
      %54 = sbr.rel (0) target = $region25
    $region24: #{tpu_custom_call.1} parent=1 // pred_region
      %s56 = ssub.s32 128, 128
      %57 = vsyncadd [#allocation5], %s56
      %s59 = sshll.u32 [#allocation6], 4
      %s60 = int_to_ptr.vmem [resolvable:$true] %s59
      %62 = dma.vmem_to_hbm [thread:$0]  %s60, 128, %s4, [#allocation5]
    $region25: #{tpu_custom_call.1} parent=1 // pred_fallthru
      _
    // Predicated region
    $region26: #{tpu_custom_call.1} parent=1 // pred_check
      _
    $region27: #{tpu_custom_call.1} parent=1 // pred_check_branch
      %64 = sbr.rel (0) target = $region29
    $region28: #{tpu_custom_call.1} parent=1 // pred_region
      %65 = dma.done [#allocation5], 128
    $region29: #{tpu_custom_call.1} parent=1 // pred_fallthru
      _
    %66 = vsyncpa [#allocation4], 1
    %67 = vsyncpa [#allocation5], 1

</llo_original>
